<compile_context>
chip_gen: v7x
topology: tpu7x:2x2x1
jax: 0.10.0
libtpu: 0.0.40
codegen_flags: <defaults>
</compile_context>

<pallas_src>
import functools

import jax
import jax.numpy as jnp
from jax import lax
from jax.experimental import pallas as pl
from jax.experimental.pallas import tpu as pltpu

EPS = 1e-5
NEG_SLOPE = 0.2


def _round_up(x, m):
    return (x + m - 1) // m * m


# ---------------------------------------------------------------------------
# Phase 1: tiled im2col matmul (bf16 -> MXU -> f32) + per-tile BN partial stats
# ---------------------------------------------------------------------------
def _conv_stats_kernel(p_ref, w_ref, conv_ref, stats_ref, acc_ref):
    # p_ref: (TM, TK) bf16, w_ref: (TK, Cpad) bf16
    # conv_ref: (TM, Cpad) f32, stats_ref: (1, 2, Cpad) f32, acc_ref: (TM, Cpad) f32
    k = pl.program_id(1)

    @pl.when(k == 0)
    def _():
        acc_ref[...] = jnp.zeros_like(acc_ref)

    acc_ref[...] += jnp.dot(p_ref[...], w_ref[...],
                            preferred_element_type=jnp.float32)

    @pl.when(k == pl.num_programs(1) - 1)
    def _():
        acc = acc_ref[...]
        conv_ref[...] = acc
        row_sum = jnp.sum(acc, axis=0, keepdims=True)        # (1, Cpad)
        row_sq = jnp.sum(acc * acc, axis=0, keepdims=True)   # (1, Cpad)
        stats_ref[...] = jnp.concatenate([row_sum, row_sq], axis=0)[None]


# ---------------------------------------------------------------------------
# Phase 2: normalize with global batch stats + affine + LeakyReLU(0.2)
# ---------------------------------------------------------------------------
def _bn_lrelu_kernel(y_ref, scale_ref, shift_ref, o_ref):
    z = y_ref[...] * scale_ref[...] + shift_ref[...]
    o_ref[...] = jnp.where(z >= 0.0, z, NEG_SLOPE * z).astype(o_ref.dtype)


def _im2col(x_pad, kh, kw, stride, oh, ow):
    # x_pad: (N, C, Hp, Wp) -> (N*OH*OW, C*KH*KW), K flattened as (C, kh, kw).
    n, c = x_pad.shape[0], x_pad.shape[1]
    cols = []
    for i in range(kh):
        for j in range(kw):
            cols.append(x_pad[:, :, i:i + stride * oh:stride, j:j + stride * ow:stride])
    patches = jnp.stack(cols, axis=0)              # (KH*KW, N, C, OH, OW)
    patches = patches.transpose(1, 3, 4, 2, 0)     # (N, OH, OW, C, KH*KW)
    return patches.reshape(n * oh * ow, c * kh * kw)


@functools.partial(jax.jit, static_argnames=("stride",))
def cnn_block_forward(x, weight, gamma, beta, *, stride):
    """x: (N, C_in, H, W) NCHW.  weight: (C_out, C_in, 4, 4).  Returns NCHW."""
    n, c_in, h, w = x.shape
    c_out, _, kh, kw = weight.shape

    # reflect pad of 1 (padding_mode='reflect')
    x_pad = jnp.pad(x, ((0, 0), (0, 0), (1, 1), (1, 1)), mode="reflect")
    oh = (h + 2 - kh) // stride + 1
    ow = (w + 2 - kw) // stride + 1

    # im2col in bf16 (MXU-native inputs, half the HBM bytes for the patch matrix)
    patches = _im2col(x_pad.astype(jnp.bfloat16), kh, kw, stride, oh, ow)
    w2d = weight.reshape(c_out, c_in * kh * kw).T.astype(jnp.bfloat16)

    m, k_dim = patches.shape

    # MXU / lane-aligned padded dims and tile sizes.
    c_out_pad = _round_up(c_out, 128)
    k_req = _round_up(k_dim, 128)
    tile_k = min(k_req, 1024)
    k_pad = _round_up(k_dim, tile_k)
    tile_m = _round_up(m, 8) if m <= 512 else 512
    m_pad = _round_up(m, tile_m)

    # Zero rows/cols contribute nothing to the matmul or to sum / sum_sq,
    # so padded stats stay exact as long as we divide by the true m below.
    patches_p = jnp.pad(patches, ((0, m_pad - m), (0, k_pad - k_dim)))
    w_p = jnp.pad(w2d, ((0, k_pad - k_dim), (0, c_out_pad - c_out)))

    n_m = m_pad // tile_m
    n_k = k_pad // tile_k

    conv_flat, stats = pl.pallas_call(
        _conv_stats_kernel,
        out_shape=(
            jax.ShapeDtypeStruct((m_pad, c_out_pad), jnp.float32),
            jax.ShapeDtypeStruct((n_m, 2, c_out_pad), jnp.float32),
        ),
        grid_spec=pltpu.PrefetchScalarGridSpec(
            num_scalar_prefetch=0,
            grid=(n_m, n_k),
            in_specs=[
                pl.BlockSpec((tile_m, tile_k), lambda i, kk: (i, kk)),
                pl.BlockSpec((tile_k, c_out_pad), lambda i, kk: (kk, 0)),
            ],
            out_specs=(
                pl.BlockSpec((tile_m, c_out_pad), lambda i, kk: (i, 0)),
                pl.BlockSpec((1, 2, c_out_pad), lambda i, kk: (i, 0, 0)),
            ),
            scratch_shapes=[pltpu.VMEM((tile_m, c_out_pad), jnp.float32)],
        ),
        compiler_params=pltpu.CompilerParams(
            dimension_semantics=("parallel", "arbitrary"),
            vmem_limit_bytes=32 * 1024 * 1024,
        ),
    )(patches_p, w_p)

    # Global training-mode BatchNorm2d statistics (biased variance over the true
    # M = N*OH*OW rows), folded into a per-channel scale/shift.
    total = jnp.sum(stats, axis=0)                 # (2, c_out_pad)
    mean = total[0] / m
    var = total[1] / m - mean * mean
    inv_std = lax.rsqrt(var + EPS)
    gamma_p = jnp.pad(gamma.astype(jnp.float32), (0, c_out_pad - c_out))
    beta_p = jnp.pad(beta.astype(jnp.float32), (0, c_out_pad - c_out))
    scale_vec = gamma_p * inv_std
    shift_vec = beta_p - mean * scale_vec
    scale = scale_vec.reshape(1, c_out_pad)
    shift = shift_vec.reshape(1, c_out_pad)

    out_flat = pl.pallas_call(
        _bn_lrelu_kernel,
        out_shape=jax.ShapeDtypeStruct((m_pad, c_out_pad), jnp.float32),
        grid_spec=pltpu.PrefetchScalarGridSpec(
            num_scalar_prefetch=0,
            grid=(n_m,),
            in_specs=[
                pl.BlockSpec((tile_m, c_out_pad), lambda i: (i, 0)),
                pl.BlockSpec((1, c_out_pad), lambda i: (0, 0)),
                pl.BlockSpec((1, c_out_pad), lambda i: (0, 0)),
            ],
            out_specs=pl.BlockSpec((tile_m, c_out_pad), lambda i: (i, 0)),
        ),
        compiler_params=pltpu.CompilerParams(
            dimension_semantics=("parallel",),
            vmem_limit_bytes=32 * 1024 * 1024,
        ),
    )(conv_flat, scale, shift)

    out = out_flat[:m, :c_out].reshape(n, oh, ow, c_out)
    # TODO(synk): return NHWC and let the consumer fuse to avoid this full-HBM
    # permute; NCHW kept to match the PyTorch module's output layout exactly.
    return out.transpose(0, 3, 1, 2)


def _reference(x, weight, gamma, beta, stride, *, match_bf16=False):
    if match_bf16:
        x = x.astype(jnp.bfloat16).astype(jnp.float32)
        weight = weight.astype(jnp.bfloat16).astype(jnp.float32)
    x_pad = jnp.pad(x, ((0, 0), (0, 0), (1, 1), (1, 1)), mode="reflect")
    conv = lax.conv_general_dilated(
        x_pad.astype(jnp.float32), weight.astype(jnp.float32),
        window_strides=(stride, stride), padding="VALID",
        dimension_numbers=("NCHW", "OIHW", "NCHW"))
    mean = conv.mean(axis=(0, 2, 3), keepdims=True)
    var = conv.var(axis=(0, 2, 3), keepdims=True)
    y = (conv - mean) / jnp.sqrt(var + EPS)
    y = y * gamma.reshape(1, -1, 1, 1) + beta.reshape(1, -1, 1, 1)
    return jnp.where(y >= 0.0, y, NEG_SLOPE * y)


if __name__ == "__main__":
    key = jax.random.PRNGKey(0)

    def run_case(n, c_in, h, w, c_out, stride, case_key):
        k_x, k_w, k_g, k_b = jax.random.split(case_key, 4)
        x = jax.random.normal(k_x, (n, c_in, h, w), dtype=jnp.float32)
        weight = 0.05 * jax.random.normal(k_w, (c_out, c_in, 4, 4), dtype=jnp.float32)
        gamma = 1.0 + 0.1 * jax.random.normal(k_g, (c_out,), dtype=jnp.float32)
        beta = 0.1 * jax.random.normal(k_b, (c_out,), dtype=jnp.float32)

        out = jax.block_until_ready(
            cnn_block_forward(x, weight, gamma, beta, stride=stride))
        oh = (h + 2 - 4) // stride + 1
        ow = (w + 2 - 4) // stride + 1
        assert out.shape == (n, c_out, oh, ow), out.shape

        # Tight check against a reference using the same bf16 operand precision.
        ref_m = _reference(x, weight, gamma, beta, stride, match_bf16=True)
        err_m = float(jnp.max(jnp.abs(out - ref_m)))
        assert jnp.allclose(out, ref_m, atol=2e-3, rtol=2e-3), err_m
        # Looser sanity check against the pure-f32 reference.
        ref_f = _reference(x, weight, gamma, beta, stride)
        err_f = float(jnp.max(jnp.abs(out - ref_f)))
        assert jnp.allclose(out, ref_f, atol=5e-2, rtol=5e-2), err_f

    k1, k2 = jax.random.split(key)
    # CNNBlock(4, 8, stride=2) on a (2, 4, 16, 16) input (toy shape).
    run_case(2, 4, 16, 16, 8, 2, k1)
    # Slightly larger case that exercises the multi-M-tile BN-stats path.
    run_case(4, 8, 32, 32, 16, 2, k2)

    print("KERNEL_OK")
</pallas_src>

<mosaic_0001>
module attributes {stable_mosaic.version = 11 : i64} {
  func.func @_conv_stats_kernel(%arg0: i32, %arg1: i32, %arg2: memref<128x128xbf16, #tpu.memory_space<vmem>>, %arg3: memref<128x128xbf16, #tpu.memory_space<vmem>>, %arg4: memref<128x128xf32, #tpu.memory_space<vmem>>, %arg5: memref<1x2x128xf32, #tpu.memory_space<vmem>>, %arg6: memref<128x128xf32, #tpu.memory_space<vmem>>) attributes {dimension_semantics = [#tpu.dimension_semantics<parallel>, #tpu.dimension_semantics<arbitrary>], iteration_bounds = array<i64: 1, 1>, scalar_prefetch = 0 : i64, scratch_operands = 1 : i64, tpu.core_type = #tpu.core_type<tc>, window_params = [{transform_indices = @transform_0, window_bounds = array<i64: 128, 128>}, {transform_indices = @transform_1, window_bounds = array<i64: 128, 128>}, {transform_indices = @transform_2, window_bounds = array<i64: 128, 128>}, {transform_indices = @transform_3, window_bounds = array<i64: 1, 2, 128>}]} {
    %c0_i32 = arith.constant 0 : i32
    %0 = arith.cmpi eq, %arg1, %c0_i32 : i32
    %1 = arith.extui %0 : i1 to i32
    %c0_i32_0 = arith.constant 0 : i32
    %2 = arith.cmpi ne, %1, %c0_i32_0 : i32
    scf.if %2 {
      %cst_10 = arith.constant 0.000000e+00 : f32
      %12 = vector.broadcast %cst_10 : f32 to vector<128x128xf32>
      %c0_11 = arith.constant 0 : index
      %c0_12 = arith.constant 0 : index
      %13 = vector.load %arg6[%c0_11, %c0_12] : memref<128x128xf32, #tpu.memory_space<vmem>>, vector<128x128xf32>
      tpu.vector_store %arg6[%c0_11, %c0_12], %12 {strides = array<i32>} : memref<128x128xf32, #tpu.memory_space<vmem>>, vector<128x128xf32>,
    } else {
    }
    %c0 = arith.constant 0 : index
    %c0_1 = arith.constant 0 : index
    %3 = vector.load %arg6[%c0, %c0_1] : memref<128x128xf32, #tpu.memory_space<vmem>>, vector<128x128xf32>
    %c0_2 = arith.constant 0 : index
    %c0_3 = arith.constant 0 : index
    %4 = vector.load %arg2[%c0_2, %c0_3] : memref<128x128xbf16, #tpu.memory_space<vmem>>, vector<128x128xbf16>
    %c0_4 = arith.constant 0 : index
    %c0_5 = arith.constant 0 : index
    %5 = vector.load %arg3[%c0_4, %c0_5] : memref<128x128xbf16, #tpu.memory_space<vmem>>, vector<128x128xbf16>
    %cst = arith.constant dense<0.000000e+00> : vector<128x128xf32>
    %6 = tpu.matmul %4, %5, %cst {dimension_numbers = #tpu.dot_dimension_numbers<[1], [0], [0], [1], [0, 0, 1, 1], [], []>} : vector<128x128xbf16>, vector<128x128xbf16>, vector<128x128xf32> -> vector<128x128xf32>
    %7 = arith.addf %3, %6 : vector<128x128xf32>
    %c0_6 = arith.constant 0 : index
    %c0_7 = arith.constant 0 : index
    %8 = vector.load %arg6[%c0_6, %c0_7] : memref<128x128xf32, #tpu.memory_space<vmem>>, vector<128x128xf32>
    tpu.vector_store %arg6[%c0_6, %c0_7], %7 {strides = array<i32>} : memref<128x128xf32, #tpu.memory_space<vmem>>, vector<128x128xf32>,
    %c0_i32_8 = arith.constant 0 : i32
    %9 = arith.cmpi eq, %arg1, %c0_i32_8 : i32
    %10 = arith.extui %9 : i1 to i32
    %c0_i32_9 = arith.constant 0 : i32
    %11 = arith.cmpi ne, %10, %c0_i32_9 : i32
    scf.if %11 {
      %c0_10 = arith.constant 0 : index
      %c0_11 = arith.constant 0 : index
      %12 = vector.load %arg6[%c0_10, %c0_11] : memref<128x128xf32, #tpu.memory_space<vmem>>, vector<128x128xf32>
      %c0_12 = arith.constant 0 : index
      %c0_13 = arith.constant 0 : index
      %13 = vector.load %arg4[%c0_12, %c0_13] : memref<128x128xf32, #tpu.memory_space<vmem>>, vector<128x128xf32>
      tpu.vector_store %arg4[%c0_12, %c0_13], %12 {strides = array<i32>} : memref<128x128xf32, #tpu.memory_space<vmem>>, vector<128x128xf32>,
      %cst_14 = arith.constant dense<0.000000e+00> : vector<128xf32>
      %14 = vector.multi_reduction <add>, %12, %cst_14 [0] : vector<128x128xf32> to vector<128xf32>
      %15 = vector.shape_cast %14 : vector<128xf32> to vector<1x128xf32>
      %16 = arith.mulf %12, %12 : vector<128x128xf32>
      %cst_15 = arith.constant dense<0.000000e+00> : vector<128xf32>
      %17 = vector.multi_reduction <add>, %16, %cst_15 [0] : vector<128x128xf32> to vector<128xf32>
      %18 = vector.shape_cast %17 : vector<128xf32> to vector<1x128xf32>
      %19 = tpu.concatenate %15, %18 in 0 : vector<1x128xf32>, vector<1x128xf32> -> vector<2x128xf32>
      %20 = vector.shape_cast %19 : vector<2x128xf32> to vector<1x2x128xf32>
      %c0_16 = arith.constant 0 : index
      %c0_17 = arith.constant 0 : index
      %c0_18 = arith.constant 0 : index
      %21 = vector.load %arg5[%c0_16, %c0_17, %c0_18] : memref<1x2x128xf32, #tpu.memory_space<vmem>>, vector<1x2x128xf32>
      tpu.vector_store %arg5[%c0_16, %c0_17, %c0_18], %20 {strides = array<i32>} : memref<1x2x128xf32, #tpu.memory_space<vmem>>, vector<1x2x128xf32>,
    } else {
    }
    return
  }
  func.func @transform_0(%arg0: i32, %arg1: i32) -> (i32, i32) {
    %c0_i32 = arith.constant 0 : i32
    return %arg0, %arg1 : i32, i32
  }
  func.func @transform_1(%arg0: i32, %arg1: i32) -> (i32, i32) {
    %c0_i32 = arith.constant 0 : i32
    %c0_i32_0 = arith.constant 0 : i32
    return %arg1, %c0_i32 : i32, i32
  }
  func.func @transform_2(%arg0: i32, %arg1: i32) -> (i32, i32) {
    %c0_i32 = arith.constant 0 : i32
    %c0_i32_0 = arith.constant 0 : i32
    return %arg0, %c0_i32 : i32, i32
  }
  func.func @transform_3(%arg0: i32, %arg1: i32) -> (i32, i32, i32) {
    %c0_i32 = arith.constant 0 : i32
    %c0_i32_0 = arith.constant 0 : i32
    %c0_i32_1 = arith.constant 0 : i32
    return %arg0, %c0_i32, %c0_i32_0 : i32, i32, i32
  }
}

module attributes {stable_mosaic.version = 11 : i64} {
  func.func @_bn_lrelu_kernel(%arg0: i32, %arg1: memref<128x128xf32, #tpu.memory_space<vmem>>, %arg2: memref<1x128xf32, #tpu.memory_space<vmem>>, %arg3: memref<1x128xf32, #tpu.memory_space<vmem>>, %arg4: memref<128x128xf32, #tpu.memory_space<vmem>>) attributes {dimension_semantics = [#tpu.dimension_semantics<parallel>], iteration_bounds = array<i64: 1>, scalar_prefetch = 0 : i64, scratch_operands = 0 : i64, tpu.core_type = #tpu.core_type<tc>, window_params = [{transform_indices = @transform_0, window_bounds = array<i64: 128, 128>}, {pipeline_mode = #tpu.pipeline_mode<synchronous>, transform_indices = @transform_1, window_bounds = array<i64: 1, 128>}, {pipeline_mode = #tpu.pipeline_mode<synchronous>, transform_indices = @transform_2, window_bounds = array<i64: 1, 128>}, {transform_indices = @transform_3, window_bounds = array<i64: 128, 128>}]} {
    %c0 = arith.constant 0 : index
    %c0_0 = arith.constant 0 : index
    %0 = vector.load %arg1[%c0, %c0_0] : memref<128x128xf32, #tpu.memory_space<vmem>>, vector<128x128xf32>
    %c0_1 = arith.constant 0 : index
    %c0_2 = arith.constant 0 : index
    %1 = vector.load %arg2[%c0_1, %c0_2] : memref<1x128xf32, #tpu.memory_space<vmem>>, vector<1x128xf32>
    %2 = vector.broadcast %1 : vector<1x128xf32> to vector<128x128xf32>
    %3 = arith.mulf %0, %2 : vector<128x128xf32>
    %c0_3 = arith.constant 0 : index
    %c0_4 = arith.constant 0 : index
    %4 = vector.load %arg3[%c0_3, %c0_4] : memref<1x128xf32, #tpu.memory_space<vmem>>, vector<1x128xf32>
    %5 = vector.broadcast %4 : vector<1x128xf32> to vector<128x128xf32>
    %6 = arith.addf %3, %5 : vector<128x128xf32>
    %cst = arith.constant 0.000000e+00 : f32
    %7 = vector.broadcast %cst : f32 to vector<128x128xf32>
    %8 = arith.cmpf oge, %6, %7 : vector<128x128xf32>
    %cst_5 = arith.constant 2.000000e-01 : f32
    %9 = vector.broadcast %cst_5 : f32 to vector<128x128xf32>
    %10 = arith.mulf %9, %6 : vector<128x128xf32>
    %11 = arith.select %8, %6, %10 : vector<128x128xi1>, vector<128x128xf32>
    %c0_6 = arith.constant 0 : index
    %c0_7 = arith.constant 0 : index
    %12 = vector.load %arg4[%c0_6, %c0_7] : memref<128x128xf32, #tpu.memory_space<vmem>>, vector<128x128xf32>
    tpu.vector_store %arg4[%c0_6, %c0_7], %11 {strides = array<i32>} : memref<128x128xf32, #tpu.memory_space<vmem>>, vector<128x128xf32>,
    return
  }
  func.func @transform_0(%arg0: i32) -> (i32, i32) {
    %c0_i32 = arith.constant 0 : i32
    %c0_i32_0 = arith.constant 0 : i32
    return %arg0, %c0_i32 : i32, i32
  }
  func.func @transform_1(%arg0: i32) -> (i32, i32) {
    %c0_i32 = arith.constant 0 : i32
    %c0_i32_0 = arith.constant 0 : i32
    %c0_i32_1 = arith.constant 0 : i32
    return %c0_i32, %c0_i32_0 : i32, i32
  }
  func.func @transform_2(%arg0: i32) -> (i32, i32) {
    %c0_i32 = arith.constant 0 : i32
    %c0_i32_0 = arith.constant 0 : i32
    %c0_i32_1 = arith.constant 0 : i32
    return %c0_i32, %c0_i32_0 : i32, i32
  }
  func.func @transform_3(%arg0: i32) -> (i32, i32) {
    %c0_i32 = arith.constant 0 : i32
    %c0_i32_0 = arith.constant 0 : i32
    return %arg0, %c0_i32 : i32, i32
  }
}

</mosaic_0001>

<llo_original>
// kernel: cnn_block_forward.3
$region0: #{cnn_block_forward.3}
  #allocation0 [shape = 'u32[]', space=smem, size = 0x4, offset = 0x4, fixed_abs, tag = 'smem constant byte address 0x4 - core index']
  #allocation1 [shape = 'u32[144,128]{1,0:T(1,128)}', space=vmem, size = 0x12000, scoped, tag = 'internal scratch']
  %s0 = inlined_call_operand.vmem [shape: f32[128,128], index: 0, kind: input, shape index: {}]
  %s1 = inlined_call_operand.vmem [shape: f32[1,128], index: 1, kind: input, shape index: {}]
  %s2 = inlined_call_operand.vmem [shape: f32[1,128], index: 2, kind: input, shape index: {}]
  %s3 = inlined_call_operand.vmem [shape: f32[128,128], index: 3, kind: output, shape index: {}]
  %s4 = sld [smem:[#allocation0]]
  $region22: #{cnn_block_forward.3} parent=0
    _
  %s6 = ssub.s32 1, %s4
  %s7 = scalar_select 0, %s6, %s4
  // Predicated region
  $region2: #{cnn_block_forward.3} parent=0 // pred_check
    _
  $region3: #{cnn_block_forward.3} parent=0 // pred_check_branch
    %9 = sbr.rel (0) target = $region5
  $region4: #{cnn_block_forward.3} parent=0 // pred_region
    _
  $region5: #{cnn_block_forward.3} parent=0 // pred_fallthru
    _
  // Predicated region
  $region6: #{cnn_block_forward.3} parent=0 // pred_check
    _
  $region7: #{cnn_block_forward.3} parent=0 // pred_check_branch
    %11 = sbr.rel (0) target = $region9
  $region8: #{cnn_block_forward.3} parent=0 // pred_region
    _
  $region9: #{cnn_block_forward.3} parent=0 // pred_fallthru
    _
  // Predicated region
  $region10: #{cnn_block_forward.3} parent=0 // pred_check
    _
  $region11: #{cnn_block_forward.3} parent=0 // pred_check_branch
    %13 = sbr.rel (0) target = $region13
  $region12: #{cnn_block_forward.3} parent=0 // pred_region
    _
  $region13: #{cnn_block_forward.3} parent=0 // pred_fallthru
    _
  %v14 = vld [vmem:[%s0] sm:$0xff]
  %v15 = vld [vmem:[%s0 + $0x8] sm:$0xff]
  %v16 = vld [vmem:[%s0 + $0x10] sm:$0xff]
  %v17 = vld [vmem:[%s0 + $0x18] sm:$0xff]
  %v18 = vld [vmem:[%s0 + $0x20] sm:$0xff]
  %v19 = vld [vmem:[%s0 + $0x28] sm:$0xff]
  %v20 = vld [vmem:[%s0 + $0x30] sm:$0xff]
  %v21 = vld [vmem:[%s0 + $0x38] sm:$0xff]
  %v22 = vld [vmem:[%s0 + $0x40] sm:$0xff]
  %v23 = vld [vmem:[%s0 + $0x48] sm:$0xff]
  %v24 = vld [vmem:[%s0 + $0x50] sm:$0xff]
  %v25 = vld [vmem:[%s0 + $0x58] sm:$0xff]
  %v26 = vld [vmem:[%s0 + $0x60] sm:$0xff]
  %v27 = vld [vmem:[%s0 + $0x68] sm:$0xff]
  %v28 = vld [vmem:[%s0 + $0x70] sm:$0xff]
  %v29 = vld [vmem:[%s0 + $0x78] sm:$0xff]
  %v30 = vld [vmem:[%s1] sm:$0x1]
  %v32 = vlaneseq
  %v33 = vshrl.u32 %v32, 7
  %v34 = vsub.s32 0, %v33
  %v35 = vrot.slane %v30, %v34
  %v37 = vmul.f32 %v14, %v35
  %v38 = vmul.f32 %v15, %v35
  %v39 = vmul.f32 %v16, %v35
  %v40 = vmul.f32 %v17, %v35
  %v41 = vmul.f32 %v18, %v35
  %v42 = vmul.f32 %v19, %v35
  %v43 = vmul.f32 %v20, %v35
  %v44 = vmul.f32 %v21, %v35
  %v45 = vmul.f32 %v22, %v35
  %v46 = vmul.f32 %v23, %v35
  %v47 = vmul.f32 %v24, %v35
  %v48 = vmul.f32 %v25, %v35
  %v49 = vmul.f32 %v26, %v35
  %v50 = vmul.f32 %v27, %v35
  %v51 = vmul.f32 %v28, %v35
  %v52 = vmul.f32 %v29, %v35
  %v53 = vld [vmem:[%s2] sm:$0x1]
  %v55 = vlaneseq
  %v56 = vshrl.u32 %v55, 7
  %v57 = vsub.s32 0, %v56
  %v58 = vrot.slane %v53, %v57
  %v60 = vadd.f32 %v37, %v58
  %v61 = vadd.f32 %v38, %v58
  %v62 = vadd.f32 %v39, %v58
  %v63 = vadd.f32 %v40, %v58
  %v64 = vadd.f32 %v41, %v58
  %v65 = vadd.f32 %v42, %v58
  %v66 = vadd.f32 %v43, %v58
  %v67 = vadd.f32 %v44, %v58
  %v68 = vadd.f32 %v45, %v58
  %v69 = vadd.f32 %v46, %v58
  %v70 = vadd.f32 %v47, %v58
  %v71 = vadd.f32 %v48, %v58
  %v72 = vadd.f32 %v49, %v58
  %v73 = vadd.f32 %v50, %v58
  %v74 = vadd.f32 %v51, %v58
  %v75 = vadd.f32 %v52, %v58
  %vm76 = vcmp.ge.f32.partialorder %v60, 0.0
  %vm77 = vcmp.ge.f32.partialorder %v61, 0.0
  %vm78 = vcmp.ge.f32.partialorder %v62, 0.0
  %vm79 = vcmp.ge.f32.partialorder %v63, 0.0
  %vm80 = vcmp.ge.f32.partialorder %v64, 0.0
  %vm81 = vcmp.ge.f32.partialorder %v65, 0.0
  %vm82 = vcmp.ge.f32.partialorder %v66, 0.0
  %vm83 = vcmp.ge.f32.partialorder %v67, 0.0
  %vm84 = vcmp.ge.f32.partialorder %v68, 0.0
  %vm85 = vcmp.ge.f32.partialorder %v69, 0.0
  %vm86 = vcmp.ge.f32.partialorder %v70, 0.0
  %vm87 = vcmp.ge.f32.partialorder %v71, 0.0
  %vm88 = vcmp.ge.f32.partialorder %v72, 0.0
  %vm89 = vcmp.ge.f32.partialorder %v73, 0.0
  %vm90 = vcmp.ge.f32.partialorder %v74, 0.0
  %vm91 = vcmp.ge.f32.partialorder %v75, 0.0
  %v92 = vmul.f32 %v60, 0.2
  %v93 = vmul.f32 %v61, 0.2
  %v94 = vmul.f32 %v62, 0.2
  %v95 = vmul.f32 %v63, 0.2
  %v96 = vmul.f32 %v64, 0.2
  %v97 = vmul.f32 %v65, 0.2
  %v98 = vmul.f32 %v66, 0.2
  %v99 = vmul.f32 %v67, 0.2
  %v100 = vmul.f32 %v68, 0.2
  %v101 = vmul.f32 %v69, 0.2
  %v102 = vmul.f32 %v70, 0.2
  %v103 = vmul.f32 %v71, 0.2
  %v104 = vmul.f32 %v72, 0.2
  %v105 = vmul.f32 %v73, 0.2
  %v106 = vmul.f32 %v74, 0.2
  %v107 = vmul.f32 %v75, 0.2
  %v108 = vsel %vm76, %v60, %v92
  %v109 = vsel %vm77, %v61, %v93
  %v110 = vsel %vm78, %v62, %v94
  %v111 = vsel %vm79, %v63, %v95
  %v112 = vsel %vm80, %v64, %v96
  %v113 = vsel %vm81, %v65, %v97
  %v114 = vsel %vm82, %v66, %v98
  %v115 = vsel %vm83, %v67, %v99
  %v116 = vsel %vm84, %v68, %v100
  %v117 = vsel %vm85, %v69, %v101
  %v118 = vsel %vm86, %v70, %v102
  %v119 = vsel %vm87, %v71, %v103
  %v120 = vsel %vm88, %v72, %v104
  %v121 = vsel %vm89, %v73, %v105
  %v122 = vsel %vm90, %v74, %v106
  %v123 = vsel %vm91, %v75, %v107
  %124 = vst [vmem:[%s3] sm:$0xff] %v108
  %125 = vst [vmem:[%s3 + $0x8] sm:$0xff] %v109
  %126 = vst [vmem:[%s3 + $0x10] sm:$0xff] %v110
  %127 = vst [vmem:[%s3 + $0x18] sm:$0xff] %v111
  %128 = vst [vmem:[%s3 + $0x20] sm:$0xff] %v112
  %129 = vst [vmem:[%s3 + $0x28] sm:$0xff] %v113
  %130 = vst [vmem:[%s3 + $0x30] sm:$0xff] %v114
  %131 = vst [vmem:[%s3 + $0x38] sm:$0xff] %v115
  %132 = vst [vmem:[%s3 + $0x40] sm:$0xff] %v116
  %133 = vst [vmem:[%s3 + $0x48] sm:$0xff] %v117
  %134 = vst [vmem:[%s3 + $0x50] sm:$0xff] %v118
  %135 = vst [vmem:[%s3 + $0x58] sm:$0xff] %v119
  %136 = vst [vmem:[%s3 + $0x60] sm:$0xff] %v120
  %137 = vst [vmem:[%s3 + $0x68] sm:$0xff] %v121
  %138 = vst [vmem:[%s3 + $0x70] sm:$0xff] %v122
  %139 = vst [vmem:[%s3 + $0x78] sm:$0xff] %v123
  // Predicated region
  $region14: #{cnn_block_forward.3} parent=0 // pred_check
    _
  $region15: #{cnn_block_forward.3} parent=0 // pred_check_branch
    %141 = sbr.rel (0) target = $region17
  $region16: #{cnn_block_forward.3} parent=0 // pred_region
    _
  $region17: #{cnn_block_forward.3} parent=0 // pred_fallthru
    _
  // Predicated region
  $region18: #{cnn_block_forward.3} parent=0 // pred_check
    _
  $region19: #{cnn_block_forward.3} parent=0 // pred_check_branch
    %143 = sbr.rel (0) target = $region21
  $region20: #{cnn_block_forward.3} parent=0 // pred_region
    _
  $region21: #{cnn_block_forward.3} parent=0 // pred_fallthru
    _

// kernel: cnn_block_forward.2
$region0: #{cnn_block_forward.2}
  #allocation0 [shape = 'u32[]', space=smem, size = 0x4, offset = 0x4, fixed_abs, tag = 'smem constant byte address 0x4 - core index']
  #allocation1 [shape = 'u32[144,128]{1,0:T(1,128)}', space=vmem, size = 0x12000, scoped, tag = 'internal scratch']
  #allocation2 [shape = 'f32[128,128]{1,0:T(8,128)}', space=vmem, size = 0x10000, scoped, tag = 'scratch operand']
  %s0 = inlined_call_operand.vmem [shape: bf16[128,128], index: 0, kind: input, shape index: {}]
  %s1 = inlined_call_operand.vmem [shape: bf16[128,128], index: 1, kind: input, shape index: {}]
  %s2 = inlined_call_operand.vmem [shape: f32[128,128], index: 2, kind: output, shape index: {0}]
  %s3 = inlined_call_operand.vmem [shape: f32[1,2,128], index: 3, kind: output, shape index: {1}]
  %4 = xla_tuple %s2, %s3
  %s5 = sld [smem:[#allocation0]]
  $region34: #{cnn_block_forward.2} parent=0
    _
  %s7 = ssub.s32 1, %s5
  %s8 = scalar_select 0, %s7, %s5
  // Predicated region
  $region2: #{cnn_block_forward.2} parent=0 // pred_check
    _
  $region3: #{cnn_block_forward.2} parent=0 // pred_check_branch
    %10 = sbr.rel (0) target = $region5
  $region4: #{cnn_block_forward.2} parent=0 // pred_region
    _
  $region5: #{cnn_block_forward.2} parent=0 // pred_fallthru
    _
  // Predicated region
  $region6: #{cnn_block_forward.2} parent=0 // pred_check
    _
  $region7: #{cnn_block_forward.2} parent=0 // pred_check_branch
    %12 = sbr.rel (0) target = $region9
  $region8: #{cnn_block_forward.2} parent=0 // pred_region
    _
  $region9: #{cnn_block_forward.2} parent=0 // pred_fallthru
    _
  %p14 = scmp.eq.s32.totalorder 0, 0
  // Predicated region
  $region10: #{cnn_block_forward.2} parent=0 // pred_check
    %p15 = pneg %p14
  $region11: #{cnn_block_forward.2} parent=0 // pred_check_branch
    %17 = sbr.rel (%p15) target = $region13
  $region12: #{cnn_block_forward.2} parent=0 // pred_region
    %18 = vst [vmem:[#allocation2] sm:$0xff] 0.0
    %19 = vst [vmem:[#allocation2 + $0x8] sm:$0xff] 0.0
    %20 = vst [vmem:[#allocation2 + $0x10] sm:$0xff] 0.0
    %21 = vst [vmem:[#allocation2 + $0x18] sm:$0xff] 0.0
    %22 = vst [vmem:[#allocation2 + $0x20] sm:$0xff] 0.0
    %23 = vst [vmem:[#allocation2 + $0x28] sm:$0xff] 0.0
    %24 = vst [vmem:[#allocation2 + $0x30] sm:$0xff] 0.0
    %25 = vst [vmem:[#allocation2 + $0x38] sm:$0xff] 0.0
    %26 = vst [vmem:[#allocation2 + $0x40] sm:$0xff] 0.0
    %27 = vst [vmem:[#allocation2 + $0x48] sm:$0xff] 0.0
    %28 = vst [vmem:[#allocation2 + $0x50] sm:$0xff] 0.0
    %29 = vst [vmem:[#allocation2 + $0x58] sm:$0xff] 0.0
    %30 = vst [vmem:[#allocation2 + $0x60] sm:$0xff] 0.0
    %31 = vst [vmem:[#allocation2 + $0x68] sm:$0xff] 0.0
    %32 = vst [vmem:[#allocation2 + $0x70] sm:$0xff] 0.0
    %33 = vst [vmem:[#allocation2 + $0x78] sm:$0xff] 0.0
  $region13: #{cnn_block_forward.2} parent=0 // pred_fallthru
    _
  %v34 = vld [vmem:[#allocation2] sm:$0xff]
  %v35 = vld [vmem:[#allocation2 + $0x8] sm:$0xff]
  %v36 = vld [vmem:[#allocation2 + $0x10] sm:$0xff]
  %v37 = vld [vmem:[#allocation2 + $0x18] sm:$0xff]
  %v38 = vld [vmem:[#allocation2 + $0x20] sm:$0xff]
  %v39 = vld [vmem:[#allocation2 + $0x28] sm:$0xff]
  %v40 = vld [vmem:[#allocation2 + $0x30] sm:$0xff]
  %v41 = vld [vmem:[#allocation2 + $0x38] sm:$0xff]
  %v42 = vld [vmem:[#allocation2 + $0x40] sm:$0xff]
  %v43 = vld [vmem:[#allocation2 + $0x48] sm:$0xff]
  %v44 = vld [vmem:[#allocation2 + $0x50] sm:$0xff]
  %v45 = vld [vmem:[#allocation2 + $0x58] sm:$0xff]
  %v46 = vld [vmem:[#allocation2 + $0x60] sm:$0xff]
  %v47 = vld [vmem:[#allocation2 + $0x68] sm:$0xff]
  %v48 = vld [vmem:[#allocation2 + $0x70] sm:$0xff]
  %v49 = vld [vmem:[#allocation2 + $0x78] sm:$0xff]
  %v50 = vld [vmem:[%s0] sm:$0xf]
  %v51 = vld [vmem:[%s0 + $0x4] sm:$0xf]
  %v52 = vld [vmem:[%s0 + $0x8] sm:$0xf]
  %v53 = vld [vmem:[%s0 + $0xc] sm:$0xf]
  %v54 = vld [vmem:[%s0 + $0x10] sm:$0xf]
  %v55 = vld [vmem:[%s0 + $0x14] sm:$0xf]
  %v56 = vld [vmem:[%s0 + $0x18] sm:$0xf]
  %v57 = vld [vmem:[%s0 + $0x1c] sm:$0xf]
  %v58 = vld [vmem:[%s0 + $0x20] sm:$0xf]
  %v59 = vld [vmem:[%s0 + $0x24] sm:$0xf]
  %v60 = vld [vmem:[%s0 + $0x28] sm:$0xf]
  %v61 = vld [vmem:[%s0 + $0x2c] sm:$0xf]
  %v62 = vld [vmem:[%s0 + $0x30] sm:$0xf]
  %v63 = vld [vmem:[%s0 + $0x34] sm:$0xf]
  %v64 = vld [vmem:[%s0 + $0x38] sm:$0xf]
  %v65 = vld [vmem:[%s0 + $0x3c] sm:$0xf]
  %v66 = vld [vmem:[%s1] sm:$0xf]
  %v67 = vld [vmem:[%s1 + $0x4] sm:$0xf]
  %v68 = vld [vmem:[%s1 + $0x8] sm:$0xf]
  %v69 = vld [vmem:[%s1 + $0xc] sm:$0xf]
  %v70 = vld [vmem:[%s1 + $0x10] sm:$0xf]
  %v71 = vld [vmem:[%s1 + $0x14] sm:$0xf]
  %v72 = vld [vmem:[%s1 + $0x18] sm:$0xf]
  %v73 = vld [vmem:[%s1 + $0x1c] sm:$0xf]
  %v74 = vld [vmem:[%s1 + $0x20] sm:$0xf]
  %v75 = vld [vmem:[%s1 + $0x24] sm:$0xf]
  %v76 = vld [vmem:[%s1 + $0x28] sm:$0xf]
  %v77 = vld [vmem:[%s1 + $0x2c] sm:$0xf]
  %v78 = vld [vmem:[%s1 + $0x30] sm:$0xf]
  %v79 = vld [vmem:[%s1 + $0x34] sm:$0xf]
  %v80 = vld [vmem:[%s1 + $0x38] sm:$0xf]
  %v81 = vld [vmem:[%s1 + $0x3c] sm:$0xf]
  %v98 = vunpack.c.l.b16 %v50
  %v99 = vunpack.c.l.b16 %v51
  %v100 = vunpack.c.l.b16 %v52
  %v101 = vunpack.c.l.b16 %v53
  %v102 = vunpack.c.l.b16 %v54
  %v103 = vunpack.c.l.b16 %v55
  %v104 = vunpack.c.l.b16 %v56
  %v105 = vunpack.c.l.b16 %v57
  %v106 = vunpack.c.l.b16 %v58
  %v107 = vunpack.c.l.b16 %v59
  %v108 = vunpack.c.l.b16 %v60
  %v109 = vunpack.c.l.b16 %v61
  %v110 = vunpack.c.l.b16 %v62
  %v111 = vunpack.c.l.b16 %v63
  %v112 = vunpack.c.l.b16 %v64
  %v113 = vunpack.c.l.b16 %v65
  %v114 = vpack.c.b16 %v99, %v98
  %v115 = vpack.c.b16 %v101, %v100
  %v116 = vpack.c.b16 %v103, %v102
  %v117 = vpack.c.b16 %v105, %v104
  %v118 = vpack.c.b16 %v107, %v106
  %v119 = vpack.c.b16 %v109, %v108
  %v120 = vpack.c.b16 %v111, %v110
  %v121 = vpack.c.b16 %v113, %v112
  %v146 = vunpack.c.l.b16 %v66
  %v147 = vunpack.c.l.b16 %v67
  %v148 = vunpack.c.l.b16 %v68
  %v149 = vunpack.c.l.b16 %v69
  %v150 = vunpack.c.l.b16 %v70
  %v151 = vunpack.c.l.b16 %v71
  %v152 = vunpack.c.l.b16 %v72
  %v153 = vunpack.c.l.b16 %v73
  %v154 = vunpack.c.l.b16 %v74
  %v155 = vunpack.c.l.b16 %v75
  %v156 = vunpack.c.l.b16 %v76
  %v157 = vunpack.c.l.b16 %v77
  %v158 = vunpack.c.l.b16 %v78
  %v159 = vunpack.c.l.b16 %v79
  %v160 = vunpack.c.l.b16 %v80
  %v161 = vunpack.c.l.b16 %v81
  %v162 = vpack.c.b16 %v147, %v146
  %v163 = vpack.c.b16 %v149, %v148
  %v164 = vpack.c.b16 %v151, %v150
  %v165 = vpack.c.b16 %v153, %v152
  %v166 = vpack.c.b16 %v155, %v154
  %v167 = vpack.c.b16 %v157, %v156
  %v168 = vpack.c.b16 %v159, %v158
  %v169 = vpack.c.b16 %v161, %v160
  %178 = vmatprep.subr.bf16.mxu0 0
  %179 = vmatpush1.bf16.msra.mxu0 %v162
  %180 = vmatprep.subr.bf16.mxu0 0
  %181 = vmatpush1.bf16.msra.mxu0 %v163
  %182 = vmatprep.subr.bf16.mxu0 0
  %183 = vmatpush1.bf16.msra.mxu0 %v164
  %184 = vmatprep.subr.bf16.mxu0 0
  %185 = vmatpush1.bf16.msra.mxu0 %v165
  %186 = vmatprep.subr.bf16.mxu0 0
  %187 = vmatpush1.bf16.msra.mxu0 %v166
  %188 = vmatprep.subr.bf16.mxu0 0
  %189 = vmatpush1.bf16.msra.mxu0 %v167
  %190 = vmatprep.subr.bf16.mxu0 0
  %191 = vmatpush1.bf16.msra.mxu0 %v168
  %192 = vmatprep.subr.bf16.mxu0 0
  %193 = vmatpush1.bf16.msra.mxu0 %v169
  %194 = vmatprep.subr.bf16.mxu0 0
  %195 = vmatpush1.bf16.msra.mxu0 0
  %196 = vmatprep.subr.bf16.mxu0 0
  %197 = vmatpush1.bf16.msra.mxu0 0
  %198 = vmatprep.subr.bf16.mxu0 0
  %199 = vmatpush1.bf16.msra.mxu0 0
  %200 = vmatprep.subr.bf16.mxu0 0
  %201 = vmatpush1.bf16.msra.mxu0 0
  %202 = vmatprep.subr.bf16.mxu0 0
  %203 = vmatpush1.bf16.msra.mxu0 0
  %204 = vmatprep.subr.bf16.mxu0 0
  %205 = vmatpush1.bf16.msra.mxu0 0
  %206 = vmatprep.subr.bf16.mxu0 0
  %207 = vmatpush1.bf16.msra.mxu0 0
  %208 = vmatprep.subr.bf16.mxu0 0
  %209 = vmatpush1.bf16.msra.mxu0 0
  %210 = vmatprep.mubr.bf16.mxu0 0
  %211 = vmatmul.mubr.bf16.gmra.mrb[0].mxu0 %v114
  %v212 = vpop.f32.mrb[0].mxu0
  %v213 = vadd.f32 0.0, %v212
  %v214 = vpop.f32.mrb[0].mxu0
  %v215 = vpop.f32.mrb[0].mxu0
  %v216 = vadd.f32 0.0, %v215
  %v217 = vpop.f32.mrb[0].mxu0
  %218 = vmatprep.mubr.bf16.mxu0 0
  %219 = vmatmul.mubr.bf16.gmra.mrb[0].mxu0 %v115
  %v220 = vpop.f32.mrb[0].mxu0
  %v221 = vadd.f32 0.0, %v220
  %v222 = vpop.f32.mrb[0].mxu0
  %v223 = vpop.f32.mrb[0].mxu0
  %v224 = vadd.f32 0.0, %v223
  %v225 = vpop.f32.mrb[0].mxu0
  %226 = vmatprep.mubr.bf16.mxu0 0
  %227 = vmatmul.mubr.bf16.gmra.mrb[0].mxu0 %v116
  %v228 = vpop.f32.mrb[0].mxu0
  %v229 = vadd.f32 0.0, %v228
  %v230 = vpop.f32.mrb[0].mxu0
  %v231 = vpop.f32.mrb[0].mxu0
  %v232 = vadd.f32 0.0, %v231
  %v233 = vpop.f32.mrb[0].mxu0
  %234 = vmatprep.mubr.bf16.mxu0 0
  %235 = vmatmul.mubr.bf16.gmra.mrb[0].mxu0 %v117
  %v236 = vpop.f32.mrb[0].mxu0
  %v237 = vadd.f32 0.0, %v236
  %v238 = vpop.f32.mrb[0].mxu0
  %v239 = vpop.f32.mrb[0].mxu0
  %v240 = vadd.f32 0.0, %v239
  %v241 = vpop.f32.mrb[0].mxu0
  %242 = vmatprep.mubr.bf16.mxu0 0
  %243 = vmatmul.mubr.bf16.gmra.mrb[0].mxu0 %v118
  %v244 = vpop.f32.mrb[0].mxu0
  %v245 = vadd.f32 0.0, %v244
  %v246 = vpop.f32.mrb[0].mxu0
  %v247 = vpop.f32.mrb[0].mxu0
  %v248 = vadd.f32 0.0, %v247
  %v249 = vpop.f32.mrb[0].mxu0
  %250 = vmatprep.mubr.bf16.mxu0 0
  %251 = vmatmul.mubr.bf16.gmra.mrb[0].mxu0 %v119
  %v252 = vpop.f32.mrb[0].mxu0
  %v253 = vadd.f32 0.0, %v252
  %v254 = vpop.f32.mrb[0].mxu0
  %v255 = vpop.f32.mrb[0].mxu0
  %v256 = vadd.f32 0.0, %v255
  %v257 = vpop.f32.mrb[0].mxu0
  %258 = vmatprep.mubr.bf16.mxu0 0
  %259 = vmatmul.mubr.bf16.gmra.mrb[0].mxu0 %v120
  %v260 = vpop.f32.mrb[0].mxu0
  %v261 = vadd.f32 0.0, %v260
  %v262 = vpop.f32.mrb[0].mxu0
  %v263 = vpop.f32.mrb[0].mxu0
  %v264 = vadd.f32 0.0, %v263
  %v265 = vpop.f32.mrb[0].mxu0
  %266 = vmatprep.mubr.bf16.mxu0 0
  %267 = vmatmul.mubr.bf16.gmra.mrb[0].mxu0 %v121
  %v268 = vpop.f32.mrb[0].mxu0
  %v269 = vadd.f32 0.0, %v268
  %v270 = vpop.f32.mrb[0].mxu0
  %v271 = vpop.f32.mrb[0].mxu0
  %v272 = vadd.f32 0.0, %v271
  %v273 = vpop.f32.mrb[0].mxu0
  %274 = vdwg.mxu0
  %v275 = vadd.f32 %v34, %v213
  %v276 = vadd.f32 %v35, %v216
  %v277 = vadd.f32 %v36, %v221
  %v278 = vadd.f32 %v37, %v224
  %v279 = vadd.f32 %v38, %v229
  %v280 = vadd.f32 %v39, %v232
  %v281 = vadd.f32 %v40, %v237
  %v282 = vadd.f32 %v41, %v240
  %v283 = vadd.f32 %v42, %v245
  %v284 = vadd.f32 %v43, %v248
  %v285 = vadd.f32 %v44, %v253
  %v286 = vadd.f32 %v45, %v256
  %v287 = vadd.f32 %v46, %v261
  %v288 = vadd.f32 %v47, %v264
  %v289 = vadd.f32 %v48, %v269
  %v290 = vadd.f32 %v49, %v272
  %291 = vst [vmem:[#allocation2] sm:$0xff] %v275
  %292 = vst [vmem:[#allocation2 + $0x8] sm:$0xff] %v276
  %293 = vst [vmem:[#allocation2 + $0x10] sm:$0xff] %v277
  %294 = vst [vmem:[#allocation2 + $0x18] sm:$0xff] %v278
  %295 = vst [vmem:[#allocation2 + $0x20] sm:$0xff] %v279
  %296 = vst [vmem:[#allocation2 + $0x28] sm:$0xff] %v280
  %297 = vst [vmem:[#allocation2 + $0x30] sm:$0xff] %v281
  %298 = vst [vmem:[#allocation2 + $0x38] sm:$0xff] %v282
  %299 = vst [vmem:[#allocation2 + $0x40] sm:$0xff] %v283
  %300 = vst [vmem:[#allocation2 + $0x48] sm:$0xff] %v284
  %301 = vst [vmem:[#allocation2 + $0x50] sm:$0xff] %v285
  %302 = vst [vmem:[#allocation2 + $0x58] sm:$0xff] %v286
  %303 = vst [vmem:[#allocation2 + $0x60] sm:$0xff] %v287
  %304 = vst [vmem:[#allocation2 + $0x68] sm:$0xff] %v288
  %305 = vst [vmem:[#allocation2 + $0x70] sm:$0xff] %v289
  %306 = vst [vmem:[#allocation2 + $0x78] sm:$0xff] %v290
  // Predicated region
  $region14: #{cnn_block_forward.2} parent=0 // pred_check
    %p307 = pneg %p14
  $region15: #{cnn_block_forward.2} parent=0 // pred_check_branch
    %309 = sbr.rel (%p307) target = $region17
  $region16: #{cnn_block_forward.2} parent=0 // pred_region
    %v310 = vld [vmem:[#allocation2] sm:$0xff]
    %v311 = vld [vmem:[#allocation2 + $0x8] sm:$0xff]
    %v312 = vld [vmem:[#allocation2 + $0x10] sm:$0xff]
    %v313 = vld [vmem:[#allocation2 + $0x18] sm:$0xff]
    %v314 = vld [vmem:[#allocation2 + $0x20] sm:$0xff]
    %v315 = vld [vmem:[#allocation2 + $0x28] sm:$0xff]
    %v316 = vld [vmem:[#allocation2 + $0x30] sm:$0xff]
    %v317 = vld [vmem:[#allocation2 + $0x38] sm:$0xff]
    %v318 = vld [vmem:[#allocation2 + $0x40] sm:$0xff]
    %v319 = vld [vmem:[#allocation2 + $0x48] sm:$0xff]
    %v320 = vld [vmem:[#allocation2 + $0x50] sm:$0xff]
    %v321 = vld [vmem:[#allocation2 + $0x58] sm:$0xff]
    %v322 = vld [vmem:[#allocation2 + $0x60] sm:$0xff]
    %v323 = vld [vmem:[#allocation2 + $0x68] sm:$0xff]
    %v324 = vld [vmem:[#allocation2 + $0x70] sm:$0xff]
    %v325 = vld [vmem:[#allocation2 + $0x78] sm:$0xff]
    %326 = vst [vmem:[%s2] sm:$0xff] %v310
    %327 = vst [vmem:[%s2 + $0x8] sm:$0xff] %v311
    %328 = vst [vmem:[%s2 + $0x10] sm:$0xff] %v312
    %329 = vst [vmem:[%s2 + $0x18] sm:$0xff] %v313
    %330 = vst [vmem:[%s2 + $0x20] sm:$0xff] %v314
    %331 = vst [vmem:[%s2 + $0x28] sm:$0xff] %v315
    %332 = vst [vmem:[%s2 + $0x30] sm:$0xff] %v316
    %333 = vst [vmem:[%s2 + $0x38] sm:$0xff] %v317
    %334 = vst [vmem:[%s2 + $0x40] sm:$0xff] %v318
    %335 = vst [vmem:[%s2 + $0x48] sm:$0xff] %v319
    %336 = vst [vmem:[%s2 + $0x50] sm:$0xff] %v320
    %337 = vst [vmem:[%s2 + $0x58] sm:$0xff] %v321
    %338 = vst [vmem:[%s2 + $0x60] sm:$0xff] %v322
    %339 = vst [vmem:[%s2 + $0x68] sm:$0xff] %v323
    %340 = vst [vmem:[%s2 + $0x70] sm:$0xff] %v324
    %341 = vst [vmem:[%s2 + $0x78] sm:$0xff] %v325
    %v342 = vadd.f32 %v310, %v311
    %v343 = vadd.f32 %v342, %v312
    %v344 = vadd.f32 %v343, %v313
    %v345 = vadd.f32 %v344, %v314
    %v346 = vadd.f32 %v345, %v315
    %v347 = vadd.f32 %v346, %v316
    %v348 = vadd.f32 %v347, %v317
    %v349 = vadd.f32 %v348, %v318
    %v350 = vadd.f32 %v349, %v319
    %v351 = vadd.f32 %v350, %v320
    %v352 = vadd.f32 %v351, %v321
    %v353 = vadd.f32 %v352, %v322
    %v354 = vadd.f32 %v353, %v323
    %v355 = vadd.f32 %v354, %v324
    %v356 = vadd.f32 %v355, %v325
    %v357 = vrot.slane %v356, 4
    %v358 = vadd.f32 %v356, %v357
    %v359 = vrot.slane %v358, 2
    %v360 = vadd.f32 %v358, %v359
    %v361 = vrot.slane %v360, 1
    %v362 = vadd.f32 %v360, %v361
    %v363 = vmul.f32 %v310, %v310
    %v364 = vmul.f32 %v311, %v311
    %v365 = vmul.f32 %v312, %v312
    %v366 = vmul.f32 %v313, %v313
    %v367 = vmul.f32 %v314, %v314
    %v368 = vmul.f32 %v315, %v315
    %v369 = vmul.f32 %v316, %v316
    %v370 = vmul.f32 %v317, %v317
    %v371 = vmul.f32 %v318, %v318
    %v372 = vmul.f32 %v319, %v319
    %v373 = vmul.f32 %v320, %v320
    %v374 = vmul.f32 %v321, %v321
    %v375 = vmul.f32 %v322, %v322
    %v376 = vmul.f32 %v323, %v323
    %v377 = vmul.f32 %v324, %v324
    %v378 = vmul.f32 %v325, %v325
    %v379 = vadd.f32 %v363, %v364
    %v380 = vadd.f32 %v379, %v365
    %v381 = vadd.f32 %v380, %v366
    %v382 = vadd.f32 %v381, %v367
    %v383 = vadd.f32 %v382, %v368
    %v384 = vadd.f32 %v383, %v369
    %v385 = vadd.f32 %v384, %v370
    %v386 = vadd.f32 %v385, %v371
    %v387 = vadd.f32 %v386, %v372
    %v388 = vadd.f32 %v387, %v373
    %v389 = vadd.f32 %v388, %v374
    %v390 = vadd.f32 %v389, %v375
    %v391 = vadd.f32 %v390, %v376
    %v392 = vadd.f32 %v391, %v377
    %v393 = vadd.f32 %v392, %v378
    %v394 = vrot.slane %v393, 4
    %v395 = vadd.f32 %v393, %v394
    %v396 = vrot.slane %v395, 2
    %v397 = vadd.f32 %v395, %v396
    %v398 = vrot.slane %v397, 1
    %v399 = vadd.f32 %v397, %v398
    %vm400 = vcmask 1040384
    %v401 = vsel %vm400, %v362, %v399
    %402 = vst [vmem:[%s3] sm:$0x3] %v401
  $region17: #{cnn_block_forward.2} parent=0 // pred_fallthru
    _
  // Predicated region
  $region18: #{cnn_block_forward.2} parent=0 // pred_check
    _
  $region19: #{cnn_block_forward.2} parent=0 // pred_check_branch
    %404 = sbr.rel (0) target = $region21
  $region20: #{cnn_block_forward.2} parent=0 // pred_region
    _
  $region21: #{cnn_block_forward.2} parent=0 // pred_fallthru
    _
  // Predicated region
  $region22: #{cnn_block_forward.2} parent=0 // pred_check
    _
  $region23: #{cnn_block_forward.2} parent=0 // pred_check_branch
    %406 = sbr.rel (0) target = $region25
  $region24: #{cnn_block_forward.2} parent=0 // pred_region
    _
  $region25: #{cnn_block_forward.2} parent=0 // pred_fallthru
    _
  // Predicated region
  $region26: #{cnn_block_forward.2} parent=0 // pred_check
    _
  $region27: #{cnn_block_forward.2} parent=0 // pred_check_branch
    %408 = sbr.rel (0) target = $region29
  $region28: #{cnn_block_forward.2} parent=0 // pred_region
    _
  $region29: #{cnn_block_forward.2} parent=0 // pred_fallthru
    _
  // Predicated region
  $region30: #{cnn_block_forward.2} parent=0 // pred_check
    _
  $region31: #{cnn_block_forward.2} parent=0 // pred_check_branch
    %410 = sbr.rel (0) target = $region33
  $region32: #{cnn_block_forward.2} parent=0 // pred_region
    _
  $region33: #{cnn_block_forward.2} parent=0 // pred_fallthru
    _

</llo_original>
